<compile_context>
chip_gen: v7x
topology: tpu7x:2x2x1
jax: 0.10.0
libtpu: 0.0.40
codegen_flags: <defaults>
</compile_context>

<pallas_src>
import functools

import jax
import jax.numpy as jnp
from jax.experimental import pallas as pl
from jax.experimental.pallas import tpu as pltpu

LANE = 128
H1, H2 = 256, 128  # hidden sizes of the head


def _round_up(x, m):
    return ((x + m - 1) // m) * m


def _mlp_head_kernel(x_ref, w1_ref, b1_ref, w2_ref, b2_ref, w3_ref, b3_ref, o_ref):
    # x arrives in its native dtype; cast to bf16 on the VPU (hidden under the input DMA).
    x = x_ref[...].astype(jnp.bfloat16)

    h1 = jnp.dot(x, w1_ref[...], preferred_element_type=jnp.float32) + b1_ref[...]
    h1 = jnp.maximum(h1, 0.0)

    h2 = jnp.dot(h1.astype(jnp.bfloat16), w2_ref[...],
                 preferred_element_type=jnp.float32) + b2_ref[...]
    h2 = jnp.maximum(h2, 0.0)

    out = jnp.dot(h2.astype(jnp.bfloat16), w3_ref[...],
                  preferred_element_type=jnp.float32) + b3_ref[...]
    o_ref[...] = out.astype(o_ref.dtype)  # bf16, lane-dense (padded-to-128) store


@functools.partial(jax.jit, static_argnames=("tb",))
def classification_head(x, params, *, tb=512):
    """x: [B, input_dim]. params: w1,b1,w2,b2,w3,b3 with w stored as [in, out], b as [1, out]."""
    w1, b1 = params["w1"], params["b1"]
    w2, b2 = params["w2"], params["b2"]
    w3, b3 = params["w3"], params["b3"]

    B, input_dim = x.shape
    num_classes = w3.shape[1]

    # --- Pad the tiny class dimension up to a dense 128-lane output (zero cols, sliced off). ---
    n_pad = _round_up(max(num_classes, LANE), LANE)
    w3p = jnp.zeros((w3.shape[0], n_pad), w3.dtype).at[:, :num_classes].set(w3)
    b3p = jnp.zeros((1, n_pad), b3.dtype).at[:, :num_classes].set(b3)

    # --- bf16 MXU operands for the (tiny, VMEM-resident) weights; biases stay f32. ---
    w1b = w1.astype(jnp.bfloat16)
    w2b = w2.astype(jnp.bfloat16)
    w3b = w3p.astype(jnp.bfloat16)
    b1f = b1.astype(jnp.float32)
    b2f = b2.astype(jnp.float32)
    b3f = b3p.astype(jnp.float32)

    # --- Batch tiling: no wrapper pad, Pallas masks the ragged last block. ---
    if B < 16:
        TB = B                                      # full-extent block (always legal)
    else:
        TB = min(tb, _round_up(B, 16))              # multiple of 16 for bf16 sublane packing
        if pl.cdiv(B, TB) < 2:
            # Guarantee >=2 grid steps so ("parallel",) can use both v7x TensorCores.
            TB = _round_up(pl.cdiv(B, 2), 16)
    grid = (pl.cdiv(B, TB),)

    # x / out blocks march with the grid; weights & biases are resident, single-buffered.
    x_spec = pl.BlockSpec((TB, input_dim), lambda i: (i, 0))
    out_spec = pl.BlockSpec((TB, n_pad), lambda i: (i, 0))
    resident = lambda shape: pl.BlockSpec(
        shape, lambda i: tuple(0 for _ in shape), pipeline_mode=pl.Buffered(1)
    )

    # VMEM budget: double-buffered x (native dtype) + bf16 out tiles, single-buffered weights,
    # plus f32 activation intermediates. Tight-ish cap (32 MiB) keeps headroom on v7x's 64 MiB.
    weight_bytes = (w1b.size + w2b.size + w3b.size) * 2 + (b1f.size + b2f.size + b3f.size) * 4
    tile_bytes = (
        2 * TB * input_dim * x.dtype.itemsize   # double-buffered x blocks
        + 2 * TB * n_pad * 2                    # double-buffered bf16 out blocks
        + TB * input_dim * 2                    # in-kernel bf16 copy of x
        + TB * (H1 + H2 + n_pad) * 4            # f32 intermediates h1 / h2 / out
    )
    vmem_limit = int(min(max(2 * (tile_bytes + weight_bytes), 8 << 20), 32 << 20))

    flops = 2 * B * (input_dim * H1 + H1 * H2 + H2 * n_pad)
    bytes_accessed = B * input_dim * x.dtype.itemsize + weight_bytes + B * n_pad * 2

    out_padded = pl.pallas_call(
        _mlp_head_kernel,
        out_shape=jax.ShapeDtypeStruct((B, n_pad), jnp.bfloat16),
        grid=grid,
        in_specs=[
            x_spec,
            resident(w1b.shape), resident(b1f.shape),
            resident(w2b.shape), resident(b2f.shape),
            resident(w3b.shape), resident(b3f.shape),
        ],
        out_specs=out_spec,
        compiler_params=pltpu.CompilerParams(
            dimension_semantics=("parallel",),
            vmem_limit_bytes=vmem_limit,
        ),
        cost_estimate=pl.CostEstimate(
            flops=flops, transcendentals=0, bytes_accessed=bytes_accessed
        ),
    )(x, w1b, b1f, w2b, b2f, w3b, b3f)

    # Drop padded class columns; cast the tiny logits slice back to the input dtype.
    return out_padded[:, :num_classes].astype(x.dtype)


def init_params(key, input_dim=512, num_classes=4):
    """Deterministic init mimicking nn.Linear default (uniform +- 1/sqrt(fan_in))."""
    dims = [(input_dim, H1), (H1, H2), (H2, num_classes)]
    params = {}
    keys = jax.random.split(key, 2 * len(dims))
    for i, (fan_in, fan_out) in enumerate(dims):
        bound = 1.0 / jnp.sqrt(fan_in)
        params[f"w{i + 1}"] = jax.random.uniform(
            keys[2 * i], (fan_in, fan_out), jnp.float32, -bound, bound
        )
        params[f"b{i + 1}"] = jax.random.uniform(
            keys[2 * i + 1], (fan_out,), jnp.float32, -bound, bound
        ).reshape(1, fan_out)  # 2D biases for clean TPU layout / broadcasting
    return params


def _reference(x, params):
    """Full-precision f32 reference of the PyTorch forward pass."""
    h1 = jnp.maximum(x @ params["w1"] + params["b1"], 0.0)
    h2 = jnp.maximum(h1 @ params["w2"] + params["b2"], 0.0)
    return h2 @ params["w3"] + params["b3"]


if __name__ == "__main__":
    key = jax.random.PRNGKey(0)
    k_x, k_p = jax.random.split(key)

    B, input_dim, num_classes = 2, 512, 4
    x = jax.random.normal(k_x, (B, input_dim), jnp.float32)
    params = init_params(k_p, input_dim=input_dim, num_classes=num_classes)

    out = classification_head(x, params)
    out = jax.block_until_ready(out)

    ref = _reference(x, params)
    assert out.shape == (B, num_classes), out.shape
    # bf16 matmul operands + bf16 writeback (f32 accumulation) => relaxed tolerance vs f32 ref.
    assert jnp.allclose(out, ref, atol=5e-2, rtol=5e-2), "mismatch vs reference"

    print("KERNEL_OK")
</pallas_src>

<mosaic_0001>
module attributes {stable_mosaic.version = 11 : i64} {
  func.func @_mlp_head_kernel(%arg0: i32, %arg1: memref<2x512xf32, #tpu.memory_space<vmem>>, %arg2: memref<512x256xbf16, #tpu.memory_space<vmem>>, %arg3: memref<1x256xf32, #tpu.memory_space<vmem>>, %arg4: memref<256x128xbf16, #tpu.memory_space<vmem>>, %arg5: memref<1x128xf32, #tpu.memory_space<vmem>>, %arg6: memref<128x128xbf16, #tpu.memory_space<vmem>>, %arg7: memref<1x128xf32, #tpu.memory_space<vmem>>, %arg8: memref<2x128xbf16, #tpu.memory_space<vmem>>) attributes {dimension_semantics = [#tpu.dimension_semantics<parallel>], iteration_bounds = array<i64: 1>, scalar_prefetch = 0 : i64, scratch_operands = 0 : i64, tpu.core_type = #tpu.core_type<tc>, window_params = [{transform_indices = @transform_0, window_bounds = array<i64: 2, 512>}, {pipeline_mode = #tpu.pipeline_mode<synchronous>, transform_indices = @transform_1, window_bounds = array<i64: 512, 256>}, {pipeline_mode = #tpu.pipeline_mode<synchronous>, transform_indices = @transform_2, window_bounds = array<i64: 1, 256>}, {pipeline_mode = #tpu.pipeline_mode<synchronous>, transform_indices = @transform_3, window_bounds = array<i64: 256, 128>}, {pipeline_mode = #tpu.pipeline_mode<synchronous>, transform_indices = @transform_4, window_bounds = array<i64: 1, 128>}, {pipeline_mode = #tpu.pipeline_mode<synchronous>, transform_indices = @transform_5, window_bounds = array<i64: 128, 128>}, {pipeline_mode = #tpu.pipeline_mode<synchronous>, transform_indices = @transform_6, window_bounds = array<i64: 1, 128>}, {transform_indices = @transform_7, window_bounds = array<i64: 2, 128>}]} {
    %c0 = arith.constant 0 : index
    %c0_0 = arith.constant 0 : index
    %0 = vector.load %arg1[%c0, %c0_0] : memref<2x512xf32, #tpu.memory_space<vmem>>, vector<2x512xf32>
    %1 = arith.truncf %0 : vector<2x512xf32> to vector<2x512xbf16>
    %c0_1 = arith.constant 0 : index
    %c0_2 = arith.constant 0 : index
    %2 = vector.load %arg2[%c0_1, %c0_2] : memref<512x256xbf16, #tpu.memory_space<vmem>>, vector<512x256xbf16>
    %cst = arith.constant dense<0.000000e+00> : vector<2x256xf32>
    %3 = tpu.matmul %1, %2, %cst {dimension_numbers = #tpu.dot_dimension_numbers<[1], [0], [0], [1], [0, 0, 1, 1], [], []>} : vector<2x512xbf16>, vector<512x256xbf16>, vector<2x256xf32> -> vector<2x256xf32>
    %c0_3 = arith.constant 0 : index
    %c0_4 = arith.constant 0 : index
    %4 = vector.load %arg3[%c0_3, %c0_4] : memref<1x256xf32, #tpu.memory_space<vmem>>, vector<1x256xf32>
    %5 = vector.broadcast %4 : vector<1x256xf32> to vector<2x256xf32>
    %6 = arith.addf %3, %5 : vector<2x256xf32>
    %cst_5 = arith.constant 0.000000e+00 : f32
    %7 = vector.broadcast %cst_5 : f32 to vector<2x256xf32>
    %8 = arith.maximumf %6, %7 : vector<2x256xf32>
    %9 = arith.truncf %8 : vector<2x256xf32> to vector<2x256xbf16>
    %c0_6 = arith.constant 0 : index
    %c0_7 = arith.constant 0 : index
    %10 = vector.load %arg4[%c0_6, %c0_7] : memref<256x128xbf16, #tpu.memory_space<vmem>>, vector<256x128xbf16>
    %cst_8 = arith.constant dense<0.000000e+00> : vector<2x128xf32>
    %11 = tpu.matmul %9, %10, %cst_8 {dimension_numbers = #tpu.dot_dimension_numbers<[1], [0], [0], [1], [0, 0, 1, 1], [], []>} : vector<2x256xbf16>, vector<256x128xbf16>, vector<2x128xf32> -> vector<2x128xf32>
    %c0_9 = arith.constant 0 : index
    %c0_10 = arith.constant 0 : index
    %12 = vector.load %arg5[%c0_9, %c0_10] : memref<1x128xf32, #tpu.memory_space<vmem>>, vector<1x128xf32>
    %13 = vector.broadcast %12 : vector<1x128xf32> to vector<2x128xf32>
    %14 = arith.addf %11, %13 : vector<2x128xf32>
    %cst_11 = arith.constant 0.000000e+00 : f32
    %15 = vector.broadcast %cst_11 : f32 to vector<2x128xf32>
    %16 = arith.maximumf %14, %15 : vector<2x128xf32>
    %17 = arith.truncf %16 : vector<2x128xf32> to vector<2x128xbf16>
    %c0_12 = arith.constant 0 : index
    %c0_13 = arith.constant 0 : index
    %18 = vector.load %arg6[%c0_12, %c0_13] : memref<128x128xbf16, #tpu.memory_space<vmem>>, vector<128x128xbf16>
    %cst_14 = arith.constant dense<0.000000e+00> : vector<2x128xf32>
    %19 = tpu.matmul %17, %18, %cst_14 {dimension_numbers = #tpu.dot_dimension_numbers<[1], [0], [0], [1], [0, 0, 1, 1], [], []>} : vector<2x128xbf16>, vector<128x128xbf16>, vector<2x128xf32> -> vector<2x128xf32>
    %c0_15 = arith.constant 0 : index
    %c0_16 = arith.constant 0 : index
    %20 = vector.load %arg7[%c0_15, %c0_16] : memref<1x128xf32, #tpu.memory_space<vmem>>, vector<1x128xf32>
    %21 = vector.broadcast %20 : vector<1x128xf32> to vector<2x128xf32>
    %22 = arith.addf %19, %21 : vector<2x128xf32>
    %23 = arith.truncf %22 : vector<2x128xf32> to vector<2x128xbf16>
    %c0_17 = arith.constant 0 : index
    %c0_18 = arith.constant 0 : index
    %24 = vector.load %arg8[%c0_17, %c0_18] : memref<2x128xbf16, #tpu.memory_space<vmem>>, vector<2x128xbf16>
    tpu.vector_store %arg8[%c0_17, %c0_18], %23 {strides = array<i32>} : memref<2x128xbf16, #tpu.memory_space<vmem>>, vector<2x128xbf16>,
    return
  }
  func.func @transform_0(%arg0: i32) -> (i32, i32) {
    %c0_i32 = arith.constant 0 : i32
    %c0_i32_0 = arith.constant 0 : i32
    return %arg0, %c0_i32 : i32, i32
  }
  func.func @transform_1(%arg0: i32) -> (i32, i32) {
    %c0_i32 = arith.constant 0 : i32
    %c0_i32_0 = arith.constant 0 : i32
    %c0_i32_1 = arith.constant 0 : i32
    return %c0_i32, %c0_i32_0 : i32, i32
  }
  func.func @transform_2(%arg0: i32) -> (i32, i32) {
    %c0_i32 = arith.constant 0 : i32
    %c0_i32_0 = arith.constant 0 : i32
    %c0_i32_1 = arith.constant 0 : i32
    return %c0_i32, %c0_i32_0 : i32, i32
  }
  func.func @transform_3(%arg0: i32) -> (i32, i32) {
    %c0_i32 = arith.constant 0 : i32
    %c0_i32_0 = arith.constant 0 : i32
    %c0_i32_1 = arith.constant 0 : i32
    return %c0_i32, %c0_i32_0 : i32, i32
  }
  func.func @transform_4(%arg0: i32) -> (i32, i32) {
    %c0_i32 = arith.constant 0 : i32
    %c0_i32_0 = arith.constant 0 : i32
    %c0_i32_1 = arith.constant 0 : i32
    return %c0_i32, %c0_i32_0 : i32, i32
  }
  func.func @transform_5(%arg0: i32) -> (i32, i32) {
    %c0_i32 = arith.constant 0 : i32
    %c0_i32_0 = arith.constant 0 : i32
    %c0_i32_1 = arith.constant 0 : i32
    return %c0_i32, %c0_i32_0 : i32, i32
  }
  func.func @transform_6(%arg0: i32) -> (i32, i32) {
    %c0_i32 = arith.constant 0 : i32
    %c0_i32_0 = arith.constant 0 : i32
    %c0_i32_1 = arith.constant 0 : i32
    return %c0_i32, %c0_i32_0 : i32, i32
  }
  func.func @transform_7(%arg0: i32) -> (i32, i32) {
    %c0_i32 = arith.constant 0 : i32
    %c0_i32_0 = arith.constant 0 : i32
    return %arg0, %c0_i32 : i32, i32
  }
}

</mosaic_0001>

<llo_original>
// kernel: classification_head.1
$region0: #{classification_head.1}
  #allocation0 [shape = 'u32[]', space=smem, size = 0x4, offset = 0x4, fixed_abs, tag = 'smem constant byte address 0x4 - core index']
  #allocation1 [shape = 'u32[144,128]{1,0:T(1,128)}', space=vmem, size = 0x12000, scoped, tag = 'internal scratch']
  %s0 = inlined_call_operand.vmem [shape: f32[2,512], index: 0, kind: input, shape index: {}]
  %s1 = inlined_call_operand.vmem [shape: bf16[512,256], index: 1, kind: input, shape index: {}]
  %s2 = inlined_call_operand.vmem [shape: f32[1,256], index: 2, kind: input, shape index: {}]
  %s3 = inlined_call_operand.vmem [shape: bf16[256,128], index: 3, kind: input, shape index: {}]
  %s4 = inlined_call_operand.vmem [shape: f32[1,128], index: 4, kind: input, shape index: {}]
  %s5 = inlined_call_operand.vmem [shape: bf16[128,128], index: 5, kind: input, shape index: {}]
  %s6 = inlined_call_operand.vmem [shape: f32[1,128], index: 6, kind: input, shape index: {}]
  %s7 = inlined_call_operand.vmem [shape: bf16[2,128], index: 7, kind: output, shape index: {}]
  %s8 = sld [smem:[#allocation0]]
  $region38: #{classification_head.1} parent=0
    _
  %s10 = ssub.s32 1, %s8
  %s11 = scalar_select 0, %s10, %s8
  // Predicated region
  $region2: #{classification_head.1} parent=0 // pred_check
    _
  $region3: #{classification_head.1} parent=0 // pred_check_branch
    %13 = sbr.rel (0) target = $region5
  $region4: #{classification_head.1} parent=0 // pred_region
    _
  $region5: #{classification_head.1} parent=0 // pred_fallthru
    _
  // Predicated region
  $region6: #{classification_head.1} parent=0 // pred_check
    _
  $region7: #{classification_head.1} parent=0 // pred_check_branch
    %15 = sbr.rel (0) target = $region9
  $region8: #{classification_head.1} parent=0 // pred_region
    _
  $region9: #{classification_head.1} parent=0 // pred_fallthru
    _
  // Predicated region
  $region10: #{classification_head.1} parent=0 // pred_check
    _
  $region11: #{classification_head.1} parent=0 // pred_check_branch
    %17 = sbr.rel (0) target = $region13
  $region12: #{classification_head.1} parent=0 // pred_region
    _
  $region13: #{classification_head.1} parent=0 // pred_fallthru
    _
  // Predicated region
  $region14: #{classification_head.1} parent=0 // pred_check
    _
  $region15: #{classification_head.1} parent=0 // pred_check_branch
    %19 = sbr.rel (0) target = $region17
  $region16: #{classification_head.1} parent=0 // pred_region
    _
  $region17: #{classification_head.1} parent=0 // pred_fallthru
    _
  // Predicated region
  $region18: #{classification_head.1} parent=0 // pred_check
    _
  $region19: #{classification_head.1} parent=0 // pred_check_branch
    %21 = sbr.rel (0) target = $region21
  $region20: #{classification_head.1} parent=0 // pred_region
    _
  $region21: #{classification_head.1} parent=0 // pred_fallthru
    _
  // Predicated region
  $region22: #{classification_head.1} parent=0 // pred_check
    _
  $region23: #{classification_head.1} parent=0 // pred_check_branch
    %23 = sbr.rel (0) target = $region25
  $region24: #{classification_head.1} parent=0 // pred_region
    _
  $region25: #{classification_head.1} parent=0 // pred_fallthru
    _
  // Predicated region
  $region26: #{classification_head.1} parent=0 // pred_check
    _
  $region27: #{classification_head.1} parent=0 // pred_check_branch
    %25 = sbr.rel (0) target = $region29
  $region28: #{classification_head.1} parent=0 // pred_region
    _
  $region29: #{classification_head.1} parent=0 // pred_fallthru
    _
  %v27 = vld [vmem:[%s0] sm:$0xff]
  %v29 = vcombine.high %v27, %v27
  %v31 = vunpack.c.l.s4 1983009808
  %v32 = vunpack.c.0.s8 %v31
  %v33 = vlaneseq
  %v34 = vshrl.u32 %v33, 7
  %v35 = vsub.s32 %v32, %v34
  %v36 = vrot.slane %v27, %v35
  %v38 = vunpack.c.l.s4 1983009808
  %v39 = vunpack.c.0.s8 %v38
  %v40 = vlaneseq
  %v41 = vshrl.u32 %v40, 7
  %v42 = vsub.s32 %v39, %v41
  %v43 = vrot.slane %v29, %v42
  %v44 = vcombine.high %v36, %v36
  %v45 = vcombine.high %v43, %v43
  %v50 = vpack.c.bf16 %v36, %v36
  %v51 = vpack.c.bf16 %v44, %v44
  %v52 = vpack.c.bf16 %v43, %v43
  %v53 = vpack.c.bf16 %v45, %v45
  %v54 = vld [vmem:[%s1] sm:$0xff]
  %v55 = vld [vmem:[%s1 + $0x8] sm:$0xff]
  %v56 = vld [vmem:[%s1 + $0x10] sm:$0xff]
  %v57 = vld [vmem:[%s1 + $0x18] sm:$0xff]
  %v58 = vld [vmem:[%s1 + $0x20] sm:$0xff]
  %v59 = vld [vmem:[%s1 + $0x28] sm:$0xff]
  %v60 = vld [vmem:[%s1 + $0x30] sm:$0xff]
  %v61 = vld [vmem:[%s1 + $0x38] sm:$0xff]
  %v62 = vld [vmem:[%s1 + $0x40] sm:$0xff]
  %v63 = vld [vmem:[%s1 + $0x48] sm:$0xff]
  %v64 = vld [vmem:[%s1 + $0x50] sm:$0xff]
  %v65 = vld [vmem:[%s1 + $0x58] sm:$0xff]
  %v66 = vld [vmem:[%s1 + $0x60] sm:$0xff]
  %v67 = vld [vmem:[%s1 + $0x68] sm:$0xff]
  %v68 = vld [vmem:[%s1 + $0x70] sm:$0xff]
  %v69 = vld [vmem:[%s1 + $0x78] sm:$0xff]
  %v70 = vld [vmem:[%s1 + $0x80] sm:$0xff]
  %v71 = vld [vmem:[%s1 + $0x88] sm:$0xff]
  %v72 = vld [vmem:[%s1 + $0x90] sm:$0xff]
  %v73 = vld [vmem:[%s1 + $0x98] sm:$0xff]
  %v74 = vld [vmem:[%s1 + $0xa0] sm:$0xff]
  %v75 = vld [vmem:[%s1 + $0xa8] sm:$0xff]
  %v76 = vld [vmem:[%s1 + $0xb0] sm:$0xff]
  %v77 = vld [vmem:[%s1 + $0xb8] sm:$0xff]
  %v78 = vld [vmem:[%s1 + $0xc0] sm:$0xff]
  %v79 = vld [vmem:[%s1 + $0xc8] sm:$0xff]
  %v80 = vld [vmem:[%s1 + $0xd0] sm:$0xff]
  %v81 = vld [vmem:[%s1 + $0xd8] sm:$0xff]
  %v82 = vld [vmem:[%s1 + $0xe0] sm:$0xff]
  %v83 = vld [vmem:[%s1 + $0xe8] sm:$0xff]
  %v84 = vld [vmem:[%s1 + $0xf0] sm:$0xff]
  %v85 = vld [vmem:[%s1 + $0xf8] sm:$0xff]
  %v86 = vld [vmem:[%s1 + $0x100] sm:$0xff]
  %v87 = vld [vmem:[%s1 + $0x108] sm:$0xff]
  %v88 = vld [vmem:[%s1 + $0x110] sm:$0xff]
  %v89 = vld [vmem:[%s1 + $0x118] sm:$0xff]
  %v90 = vld [vmem:[%s1 + $0x120] sm:$0xff]
  %v91 = vld [vmem:[%s1 + $0x128] sm:$0xff]
  %v92 = vld [vmem:[%s1 + $0x130] sm:$0xff]
  %v93 = vld [vmem:[%s1 + $0x138] sm:$0xff]
  %v94 = vld [vmem:[%s1 + $0x140] sm:$0xff]
  %v95 = vld [vmem:[%s1 + $0x148] sm:$0xff]
  %v96 = vld [vmem:[%s1 + $0x150] sm:$0xff]
  %v97 = vld [vmem:[%s1 + $0x158] sm:$0xff]
  %v98 = vld [vmem:[%s1 + $0x160] sm:$0xff]
  %v99 = vld [vmem:[%s1 + $0x168] sm:$0xff]
  %v100 = vld [vmem:[%s1 + $0x170] sm:$0xff]
  %v101 = vld [vmem:[%s1 + $0x178] sm:$0xff]
  %v102 = vld [vmem:[%s1 + $0x180] sm:$0xff]
  %v103 = vld [vmem:[%s1 + $0x188] sm:$0xff]
  %v104 = vld [vmem:[%s1 + $0x190] sm:$0xff]
  %v105 = vld [vmem:[%s1 + $0x198] sm:$0xff]
  %v106 = vld [vmem:[%s1 + $0x1a0] sm:$0xff]
  %v107 = vld [vmem:[%s1 + $0x1a8] sm:$0xff]
  %v108 = vld [vmem:[%s1 + $0x1b0] sm:$0xff]
  %v109 = vld [vmem:[%s1 + $0x1b8] sm:$0xff]
  %v110 = vld [vmem:[%s1 + $0x1c0] sm:$0xff]
  %v111 = vld [vmem:[%s1 + $0x1c8] sm:$0xff]
  %v112 = vld [vmem:[%s1 + $0x1d0] sm:$0xff]
  %v113 = vld [vmem:[%s1 + $0x1d8] sm:$0xff]
  %v114 = vld [vmem:[%s1 + $0x1e0] sm:$0xff]
  %v115 = vld [vmem:[%s1 + $0x1e8] sm:$0xff]
  %v116 = vld [vmem:[%s1 + $0x1f0] sm:$0xff]
  %v117 = vld [vmem:[%s1 + $0x1f8] sm:$0xff]
  %v118 = vld [vmem:[%s2] sm:$0x3]
  %v120 = vlaneseq
  %v121 = vshrl.u32 %v120, 7
  %v122 = vsub.s32 0, %v121
  %v123 = vrot.slane %v118, %v122
  %v124 = vlaneseq
  %v125 = vshrl.u32 %v124, 7
  %v126 = vsub.s32 1, %v125
  %v127 = vrot.slane %v118, %v126
  %v194 = vunpack.c.l.b16 %v54
  %v195 = vunpack.c.h.b16 %v54
  %v196 = vunpack.c.l.b16 %v55
  %v197 = vunpack.c.h.b16 %v55
  %v198 = vunpack.c.l.b16 %v56
  %v199 = vunpack.c.h.b16 %v56
  %v200 = vunpack.c.l.b16 %v57
  %v201 = vunpack.c.h.b16 %v57
  %v202 = vunpack.c.l.b16 %v58
  %v203 = vunpack.c.h.b16 %v58
  %v204 = vunpack.c.l.b16 %v59
  %v205 = vunpack.c.h.b16 %v59
  %v206 = vunpack.c.l.b16 %v60
  %v207 = vunpack.c.h.b16 %v60
  %v208 = vunpack.c.l.b16 %v61
  %v209 = vunpack.c.h.b16 %v61
  %v210 = vunpack.c.l.b16 %v62
  %v211 = vunpack.c.h.b16 %v62
  %v212 = vunpack.c.l.b16 %v63
  %v213 = vunpack.c.h.b16 %v63
  %v214 = vunpack.c.l.b16 %v64
  %v215 = vunpack.c.h.b16 %v64
  %v216 = vunpack.c.l.b16 %v65
  %v217 = vunpack.c.h.b16 %v65
  %v218 = vunpack.c.l.b16 %v66
  %v219 = vunpack.c.h.b16 %v66
  %v220 = vunpack.c.l.b16 %v67
  %v221 = vunpack.c.h.b16 %v67
  %v222 = vunpack.c.l.b16 %v68
  %v223 = vunpack.c.h.b16 %v68
  %v224 = vunpack.c.l.b16 %v69
  %v225 = vunpack.c.h.b16 %v69
  %v226 = vunpack.c.l.b16 %v70
  %v227 = vunpack.c.h.b16 %v70
  %v228 = vunpack.c.l.b16 %v71
  %v229 = vunpack.c.h.b16 %v71
  %v230 = vunpack.c.l.b16 %v72
  %v231 = vunpack.c.h.b16 %v72
  %v232 = vunpack.c.l.b16 %v73
  %v233 = vunpack.c.h.b16 %v73
  %v234 = vunpack.c.l.b16 %v74
  %v235 = vunpack.c.h.b16 %v74
  %v236 = vunpack.c.l.b16 %v75
  %v237 = vunpack.c.h.b16 %v75
  %v238 = vunpack.c.l.b16 %v76
  %v239 = vunpack.c.h.b16 %v76
  %v240 = vunpack.c.l.b16 %v77
  %v241 = vunpack.c.h.b16 %v77
  %v242 = vunpack.c.l.b16 %v78
  %v243 = vunpack.c.h.b16 %v78
  %v244 = vunpack.c.l.b16 %v79
  %v245 = vunpack.c.h.b16 %v79
  %v246 = vunpack.c.l.b16 %v80
  %v247 = vunpack.c.h.b16 %v80
  %v248 = vunpack.c.l.b16 %v81
  %v249 = vunpack.c.h.b16 %v81
  %v250 = vunpack.c.l.b16 %v82
  %v251 = vunpack.c.h.b16 %v82
  %v252 = vunpack.c.l.b16 %v83
  %v253 = vunpack.c.h.b16 %v83
  %v254 = vunpack.c.l.b16 %v84
  %v255 = vunpack.c.h.b16 %v84
  %v256 = vunpack.c.l.b16 %v85
  %v257 = vunpack.c.h.b16 %v85
  %v258 = vunpack.c.l.b16 %v86
  %v259 = vunpack.c.h.b16 %v86
  %v260 = vunpack.c.l.b16 %v87
  %v261 = vunpack.c.h.b16 %v87
  %v262 = vunpack.c.l.b16 %v88
  %v263 = vunpack.c.h.b16 %v88
  %v264 = vunpack.c.l.b16 %v89
  %v265 = vunpack.c.h.b16 %v89
  %v266 = vunpack.c.l.b16 %v90
  %v267 = vunpack.c.h.b16 %v90
  %v268 = vunpack.c.l.b16 %v91
  %v269 = vunpack.c.h.b16 %v91
  %v270 = vunpack.c.l.b16 %v92
  %v271 = vunpack.c.h.b16 %v92
  %v272 = vunpack.c.l.b16 %v93
  %v273 = vunpack.c.h.b16 %v93
  %v274 = vunpack.c.l.b16 %v94
  %v275 = vunpack.c.h.b16 %v94
  %v276 = vunpack.c.l.b16 %v95
  %v277 = vunpack.c.h.b16 %v95
  %v278 = vunpack.c.l.b16 %v96
  %v279 = vunpack.c.h.b16 %v96
  %v280 = vunpack.c.l.b16 %v97
  %v281 = vunpack.c.h.b16 %v97
  %v282 = vunpack.c.l.b16 %v98
  %v283 = vunpack.c.h.b16 %v98
  %v284 = vunpack.c.l.b16 %v99
  %v285 = vunpack.c.h.b16 %v99
  %v286 = vunpack.c.l.b16 %v100
  %v287 = vunpack.c.h.b16 %v100
  %v288 = vunpack.c.l.b16 %v101
  %v289 = vunpack.c.h.b16 %v101
  %v290 = vunpack.c.l.b16 %v102
  %v291 = vunpack.c.h.b16 %v102
  %v292 = vunpack.c.l.b16 %v103
  %v293 = vunpack.c.h.b16 %v103
  %v294 = vunpack.c.l.b16 %v104
  %v295 = vunpack.c.h.b16 %v104
  %v296 = vunpack.c.l.b16 %v105
  %v297 = vunpack.c.h.b16 %v105
  %v298 = vunpack.c.l.b16 %v106
  %v299 = vunpack.c.h.b16 %v106
  %v300 = vunpack.c.l.b16 %v107
  %v301 = vunpack.c.h.b16 %v107
  %v302 = vunpack.c.l.b16 %v108
  %v303 = vunpack.c.h.b16 %v108
  %v304 = vunpack.c.l.b16 %v109
  %v305 = vunpack.c.h.b16 %v109
  %v306 = vunpack.c.l.b16 %v110
  %v307 = vunpack.c.h.b16 %v110
  %v308 = vunpack.c.l.b16 %v111
  %v309 = vunpack.c.h.b16 %v111
  %v310 = vunpack.c.l.b16 %v112
  %v311 = vunpack.c.h.b16 %v112
  %v312 = vunpack.c.l.b16 %v113
  %v313 = vunpack.c.h.b16 %v113
  %v314 = vunpack.c.l.b16 %v114
  %v315 = vunpack.c.h.b16 %v114
  %v316 = vunpack.c.l.b16 %v115
  %v317 = vunpack.c.h.b16 %v115
  %v318 = vunpack.c.l.b16 %v116
  %v319 = vunpack.c.h.b16 %v116
  %v320 = vunpack.c.l.b16 %v117
  %v321 = vunpack.c.h.b16 %v117
  %v322 = vpack.c.b16 %v196, %v194
  %v323 = vpack.c.b16 %v197, %v195
  %v324 = vpack.c.b16 %v200, %v198
  %v325 = vpack.c.b16 %v201, %v199
  %v326 = vpack.c.b16 %v204, %v202
  %v327 = vpack.c.b16 %v205, %v203
  %v328 = vpack.c.b16 %v208, %v206
  %v329 = vpack.c.b16 %v209, %v207
  %v330 = vpack.c.b16 %v212, %v210
  %v331 = vpack.c.b16 %v213, %v211
  %v332 = vpack.c.b16 %v216, %v214
  %v333 = vpack.c.b16 %v217, %v215
  %v334 = vpack.c.b16 %v220, %v218
  %v335 = vpack.c.b16 %v221, %v219
  %v336 = vpack.c.b16 %v224, %v222
  %v337 = vpack.c.b16 %v225, %v223
  %v338 = vpack.c.b16 %v228, %v226
  %v339 = vpack.c.b16 %v229, %v227
  %v340 = vpack.c.b16 %v232, %v230
  %v341 = vpack.c.b16 %v233, %v231
  %v342 = vpack.c.b16 %v236, %v234
  %v343 = vpack.c.b16 %v237, %v235
  %v344 = vpack.c.b16 %v240, %v238
  %v345 = vpack.c.b16 %v241, %v239
  %v346 = vpack.c.b16 %v244, %v242
  %v347 = vpack.c.b16 %v245, %v243
  %v348 = vpack.c.b16 %v248, %v246
  %v349 = vpack.c.b16 %v249, %v247
  %v350 = vpack.c.b16 %v252, %v250
  %v351 = vpack.c.b16 %v253, %v251
  %v352 = vpack.c.b16 %v256, %v254
  %v353 = vpack.c.b16 %v257, %v255
  %v354 = vpack.c.b16 %v260, %v258
  %v355 = vpack.c.b16 %v261, %v259
  %v356 = vpack.c.b16 %v264, %v262
  %v357 = vpack.c.b16 %v265, %v263
  %v358 = vpack.c.b16 %v268, %v266
  %v359 = vpack.c.b16 %v269, %v267
  %v360 = vpack.c.b16 %v272, %v270
  %v361 = vpack.c.b16 %v273, %v271
  %v362 = vpack.c.b16 %v276, %v274
  %v363 = vpack.c.b16 %v277, %v275
  %v364 = vpack.c.b16 %v280, %v278
  %v365 = vpack.c.b16 %v281, %v279
  %v366 = vpack.c.b16 %v284, %v282
  %v367 = vpack.c.b16 %v285, %v283
  %v368 = vpack.c.b16 %v288, %v286
  %v369 = vpack.c.b16 %v289, %v287
  %v370 = vpack.c.b16 %v292, %v290
  %v371 = vpack.c.b16 %v293, %v291
  %v372 = vpack.c.b16 %v296, %v294
  %v373 = vpack.c.b16 %v297, %v295
  %v374 = vpack.c.b16 %v300, %v298
  %v375 = vpack.c.b16 %v301, %v299
  %v376 = vpack.c.b16 %v304, %v302
  %v377 = vpack.c.b16 %v305, %v303
  %v378 = vpack.c.b16 %v308, %v306
  %v379 = vpack.c.b16 %v309, %v307
  %v380 = vpack.c.b16 %v312, %v310
  %v381 = vpack.c.b16 %v313, %v311
  %v382 = vpack.c.b16 %v316, %v314
  %v383 = vpack.c.b16 %v317, %v315
  %v384 = vpack.c.b16 %v320, %v318
  %v385 = vpack.c.b16 %v321, %v319
  %450 = vmatprep.subr.bf16.mxu0 %v323
  %451 = vmatpush1.bf16.msra.mxu0 %v322
  %452 = vmatprep.subr.bf16.mxu0 %v325
  %453 = vmatpush1.bf16.msra.mxu0 %v324
  %454 = vmatprep.subr.bf16.mxu0 %v327
  %455 = vmatpush1.bf16.msra.mxu0 %v326
  %456 = vmatprep.subr.bf16.mxu0 %v329
  %457 = vmatpush1.bf16.msra.mxu0 %v328
  %458 = vmatprep.subr.bf16.mxu0 %v331
  %459 = vmatpush1.bf16.msra.mxu0 %v330
  %460 = vmatprep.subr.bf16.mxu0 %v333
  %461 = vmatpush1.bf16.msra.mxu0 %v332
  %462 = vmatprep.subr.bf16.mxu0 %v335
  %463 = vmatpush1.bf16.msra.mxu0 %v334
  %464 = vmatprep.subr.bf16.mxu0 %v337
  %465 = vmatpush1.bf16.msra.mxu0 %v336
  %466 = vmatprep.subr.bf16.mxu0 %v339
  %467 = vmatpush1.bf16.msra.mxu0 %v338
  %468 = vmatprep.subr.bf16.mxu0 %v341
  %469 = vmatpush1.bf16.msra.mxu0 %v340
  %470 = vmatprep.subr.bf16.mxu0 %v343
  %471 = vmatpush1.bf16.msra.mxu0 %v342
  %472 = vmatprep.subr.bf16.mxu0 %v345
  %473 = vmatpush1.bf16.msra.mxu0 %v344
  %474 = vmatprep.subr.bf16.mxu0 %v347
  %475 = vmatpush1.bf16.msra.mxu0 %v346
  %476 = vmatprep.subr.bf16.mxu0 %v349
  %477 = vmatpush1.bf16.msra.mxu0 %v348
  %478 = vmatprep.subr.bf16.mxu0 %v351
  %479 = vmatpush1.bf16.msra.mxu0 %v350
  %480 = vmatprep.subr.bf16.mxu0 %v353
  %481 = vmatpush1.bf16.msra.mxu0 %v352
  %482 = vmatprep.mubr.bf16.mxu0 %v51
  %483 = vmatmul.mubr.bf16.gmra.mrb[0].mxu0 %v50
  %v484 = vpop.f32.mrb[0].mxu0
  %v485 = vadd.f32 %v123, %v484
  %v486 = vpop.f32.mrb[0].mxu0
  %v487 = vadd.f32 %v127, %v486
  %v488 = vpop.f32.mrb[0].mxu0
  %v489 = vpop.f32.mrb[0].mxu0
  %490 = vdwg.mxu0
  %491 = vmatprep.subr.bf16.mxu0 %v355
  %492 = vmatpush1.bf16.msra.mxu0 %v354
  %493 = vmatprep.subr.bf16.mxu0 %v357
  %494 = vmatpush1.bf16.msra.mxu0 %v356
  %495 = vmatprep.subr.bf16.mxu0 %v359
  %496 = vmatpush1.bf16.msra.mxu0 %v358
  %497 = vmatprep.subr.bf16.mxu0 %v361
  %498 = vmatpush1.bf16.msra.mxu0 %v360
  %499 = vmatprep.subr.bf16.mxu0 %v363
  %500 = vmatpush1.bf16.msra.mxu0 %v362
  %501 = vmatprep.subr.bf16.mxu0 %v365
  %502 = vmatpush1.bf16.msra.mxu0 %v364
  %503 = vmatprep.subr.bf16.mxu0 %v367
  %504 = vmatpush1.bf16.msra.mxu0 %v366
  %505 = vmatprep.subr.bf16.mxu0 %v369
  %506 = vmatpush1.bf16.msra.mxu0 %v368
  %507 = vmatprep.subr.bf16.mxu0 %v371
  %508 = vmatpush1.bf16.msra.mxu0 %v370
  %509 = vmatprep.subr.bf16.mxu0 %v373
  %510 = vmatpush1.bf16.msra.mxu0 %v372
  %511 = vmatprep.subr.bf16.mxu0 %v375
  %512 = vmatpush1.bf16.msra.mxu0 %v374
  %513 = vmatprep.subr.bf16.mxu0 %v377
  %514 = vmatpush1.bf16.msra.mxu0 %v376
  %515 = vmatprep.subr.bf16.mxu0 %v379
  %516 = vmatpush1.bf16.msra.mxu0 %v378
  %517 = vmatprep.subr.bf16.mxu0 %v381
  %518 = vmatpush1.bf16.msra.mxu0 %v380
  %519 = vmatprep.subr.bf16.mxu0 %v383
  %520 = vmatpush1.bf16.msra.mxu0 %v382
  %521 = vmatprep.subr.bf16.mxu0 %v385
  %522 = vmatpush1.bf16.msra.mxu0 %v384
  %523 = vmatprep.mubr.bf16.mxu0 %v53
  %524 = vmatmul.mubr.bf16.gmra.mrb[0].mxu0 %v52
  %v525 = vpop.f32.mrb[0].mxu0
  %v526 = vadd.f32 %v485, %v525
  %v527 = vpop.f32.mrb[0].mxu0
  %v528 = vadd.f32 %v487, %v527
  %v529 = vpop.f32.mrb[0].mxu0
  %v530 = vpop.f32.mrb[0].mxu0
  %531 = vdwg.mxu0
  %v532 = vmax.f32 %v526, 0.0
  %v533 = vmax.f32 %v528, 0.0
  %v534 = vpack.c.bf16 %v532, %v532
  %v535 = vpack.c.bf16 %v533, %v533
  %v536 = vld [vmem:[%s3] sm:$0xf]
  %v537 = vld [vmem:[%s3 + $0x4] sm:$0xf]
  %v538 = vld [vmem:[%s3 + $0x8] sm:$0xf]
  %v539 = vld [vmem:[%s3 + $0xc] sm:$0xf]
  %v540 = vld [vmem:[%s3 + $0x10] sm:$0xf]
  %v541 = vld [vmem:[%s3 + $0x14] sm:$0xf]
  %v542 = vld [vmem:[%s3 + $0x18] sm:$0xf]
  %v543 = vld [vmem:[%s3 + $0x1c] sm:$0xf]
  %v544 = vld [vmem:[%s3 + $0x20] sm:$0xf]
  %v545 = vld [vmem:[%s3 + $0x24] sm:$0xf]
  %v546 = vld [vmem:[%s3 + $0x28] sm:$0xf]
  %v547 = vld [vmem:[%s3 + $0x2c] sm:$0xf]
  %v548 = vld [vmem:[%s3 + $0x30] sm:$0xf]
  %v549 = vld [vmem:[%s3 + $0x34] sm:$0xf]
  %v550 = vld [vmem:[%s3 + $0x38] sm:$0xf]
  %v551 = vld [vmem:[%s3 + $0x3c] sm:$0xf]
  %v552 = vld [vmem:[%s3 + $0x40] sm:$0xf]
  %v553 = vld [vmem:[%s3 + $0x44] sm:$0xf]
  %v554 = vld [vmem:[%s3 + $0x48] sm:$0xf]
  %v555 = vld [vmem:[%s3 + $0x4c] sm:$0xf]
  %v556 = vld [vmem:[%s3 + $0x50] sm:$0xf]
  %v557 = vld [vmem:[%s3 + $0x54] sm:$0xf]
  %v558 = vld [vmem:[%s3 + $0x58] sm:$0xf]
  %v559 = vld [vmem:[%s3 + $0x5c] sm:$0xf]
  %v560 = vld [vmem:[%s3 + $0x60] sm:$0xf]
  %v561 = vld [vmem:[%s3 + $0x64] sm:$0xf]
  %v562 = vld [vmem:[%s3 + $0x68] sm:$0xf]
  %v563 = vld [vmem:[%s3 + $0x6c] sm:$0xf]
  %v564 = vld [vmem:[%s3 + $0x70] sm:$0xf]
  %v565 = vld [vmem:[%s3 + $0x74] sm:$0xf]
  %v566 = vld [vmem:[%s3 + $0x78] sm:$0xf]
  %v567 = vld [vmem:[%s3 + $0x7c] sm:$0xf]
  %v568 = vld [vmem:[%s4] sm:$0x1]
  %v570 = vlaneseq
  %v571 = vshrl.u32 %v570, 7
  %v572 = vsub.s32 0, %v571
  %v573 = vrot.slane %v568, %v572
  %v607 = vunpack.c.l.b16 %v536
  %v608 = vunpack.c.l.b16 %v537
  %v609 = vunpack.c.l.b16 %v538
  %v610 = vunpack.c.l.b16 %v539
  %v611 = vunpack.c.l.b16 %v540
  %v612 = vunpack.c.l.b16 %v541
  %v613 = vunpack.c.l.b16 %v542
  %v614 = vunpack.c.l.b16 %v543
  %v615 = vunpack.c.l.b16 %v544
  %v616 = vunpack.c.l.b16 %v545
  %v617 = vunpack.c.l.b16 %v546
  %v618 = vunpack.c.l.b16 %v547
  %v619 = vunpack.c.l.b16 %v548
  %v620 = vunpack.c.l.b16 %v549
  %v621 = vunpack.c.l.b16 %v550
  %v622 = vunpack.c.l.b16 %v551
  %v623 = vunpack.c.l.b16 %v552
  %v624 = vunpack.c.l.b16 %v553
  %v625 = vunpack.c.l.b16 %v554
  %v626 = vunpack.c.l.b16 %v555
  %v627 = vunpack.c.l.b16 %v556
  %v628 = vunpack.c.l.b16 %v557
  %v629 = vunpack.c.l.b16 %v558
  %v630 = vunpack.c.l.b16 %v559
  %v631 = vunpack.c.l.b16 %v560
  %v632 = vunpack.c.l.b16 %v561
  %v633 = vunpack.c.l.b16 %v562
  %v634 = vunpack.c.l.b16 %v563
  %v635 = vunpack.c.l.b16 %v564
  %v636 = vunpack.c.l.b16 %v565
  %v637 = vunpack.c.l.b16 %v566
  %v638 = vunpack.c.l.b16 %v567
  %v639 = vpack.c.b16 %v608, %v607
  %v640 = vpack.c.b16 %v610, %v609
  %v641 = vpack.c.b16 %v612, %v611
  %v642 = vpack.c.b16 %v614, %v613
  %v643 = vpack.c.b16 %v616, %v615
  %v644 = vpack.c.b16 %v618, %v617
  %v645 = vpack.c.b16 %v620, %v619
  %v646 = vpack.c.b16 %v622, %v621
  %v647 = vpack.c.b16 %v624, %v623
  %v648 = vpack.c.b16 %v626, %v625
  %v649 = vpack.c.b16 %v628, %v627
  %v650 = vpack.c.b16 %v630, %v629
  %v651 = vpack.c.b16 %v632, %v631
  %v652 = vpack.c.b16 %v634, %v633
  %v653 = vpack.c.b16 %v636, %v635
  %v654 = vpack.c.b16 %v638, %v637
  %671 = vmatprep.subr.bf16.mxu0 0
  %672 = vmatpush1.bf16.msra.mxu0 %v639
  %673 = vmatprep.subr.bf16.mxu0 0
  %674 = vmatpush1.bf16.msra.mxu0 %v640
  %675 = vmatprep.subr.bf16.mxu0 0
  %676 = vmatpush1.bf16.msra.mxu0 %v641
  %677 = vmatprep.subr.bf16.mxu0 0
  %678 = vmatpush1.bf16.msra.mxu0 %v642
  %679 = vmatprep.subr.bf16.mxu0 0
  %680 = vmatpush1.bf16.msra.mxu0 %v643
  %681 = vmatprep.subr.bf16.mxu0 0
  %682 = vmatpush1.bf16.msra.mxu0 %v644
  %683 = vmatprep.subr.bf16.mxu0 0
  %684 = vmatpush1.bf16.msra.mxu0 %v645
  %685 = vmatprep.subr.bf16.mxu0 0
  %686 = vmatpush1.bf16.msra.mxu0 %v646
  %687 = vmatprep.subr.bf16.mxu0 0
  %688 = vmatpush1.bf16.msra.mxu0 %v647
  %689 = vmatprep.subr.bf16.mxu0 0
  %690 = vmatpush1.bf16.msra.mxu0 %v648
  %691 = vmatprep.subr.bf16.mxu0 0
  %692 = vmatpush1.bf16.msra.mxu0 %v649
  %693 = vmatprep.subr.bf16.mxu0 0
  %694 = vmatpush1.bf16.msra.mxu0 %v650
  %695 = vmatprep.subr.bf16.mxu0 0
  %696 = vmatpush1.bf16.msra.mxu0 %v651
  %697 = vmatprep.subr.bf16.mxu0 0
  %698 = vmatpush1.bf16.msra.mxu0 %v652
  %699 = vmatprep.subr.bf16.mxu0 0
  %700 = vmatpush1.bf16.msra.mxu0 %v653
  %701 = vmatprep.subr.bf16.mxu0 0
  %702 = vmatpush1.bf16.msra.mxu0 %v654
  %703 = vmatprep.mubr.bf16.mxu0 %v535
  %704 = vmatmul.mubr.bf16.gmra.mrb[0].mxu0 %v534
  %v705 = vpop.f32.mrb[0].mxu0
  %v706 = vadd.f32 %v573, %v705
  %v707 = vpop.f32.mrb[0].mxu0
  %v708 = vpop.f32.mrb[0].mxu0
  %v709 = vpop.f32.mrb[0].mxu0
  %710 = vdwg.mxu0
  %v711 = vmax.f32 %v706, 0.0
  %v712 = vpack.c.bf16 %v711, %v711
  %v713 = vld [vmem:[%s5] sm:$0xf]
  %v714 = vld [vmem:[%s5 + $0x4] sm:$0xf]
  %v715 = vld [vmem:[%s5 + $0x8] sm:$0xf]
  %v716 = vld [vmem:[%s5 + $0xc] sm:$0xf]
  %v717 = vld [vmem:[%s5 + $0x10] sm:$0xf]
  %v718 = vld [vmem:[%s5 + $0x14] sm:$0xf]
  %v719 = vld [vmem:[%s5 + $0x18] sm:$0xf]
  %v720 = vld [vmem:[%s5 + $0x1c] sm:$0xf]
  %v721 = vld [vmem:[%s5 + $0x20] sm:$0xf]
  %v722 = vld [vmem:[%s5 + $0x24] sm:$0xf]
  %v723 = vld [vmem:[%s5 + $0x28] sm:$0xf]
  %v724 = vld [vmem:[%s5 + $0x2c] sm:$0xf]
  %v725 = vld [vmem:[%s5 + $0x30] sm:$0xf]
  %v726 = vld [vmem:[%s5 + $0x34] sm:$0xf]
  %v727 = vld [vmem:[%s5 + $0x38] sm:$0xf]
  %v728 = vld [vmem:[%s5 + $0x3c] sm:$0xf]
  %v729 = vld [vmem:[%s6] sm:$0x1]
  %v731 = vlaneseq
  %v732 = vshrl.u32 %v731, 7
  %v733 = vsub.s32 0, %v732
  %v734 = vrot.slane %v729, %v733
  %v752 = vunpack.c.l.b16 %v713
  %v753 = vunpack.c.l.b16 %v714
  %v754 = vunpack.c.l.b16 %v715
  %v755 = vunpack.c.l.b16 %v716
  %v756 = vunpack.c.l.b16 %v717
  %v757 = vunpack.c.l.b16 %v718
  %v758 = vunpack.c.l.b16 %v719
  %v759 = vunpack.c.l.b16 %v720
  %v760 = vunpack.c.l.b16 %v721
  %v761 = vunpack.c.l.b16 %v722
  %v762 = vunpack.c.l.b16 %v723
  %v763 = vunpack.c.l.b16 %v724
  %v764 = vunpack.c.l.b16 %v725
  %v765 = vunpack.c.l.b16 %v726
  %v766 = vunpack.c.l.b16 %v727
  %v767 = vunpack.c.l.b16 %v728
  %v768 = vpack.c.b16 %v753, %v752
  %v769 = vpack.c.b16 %v755, %v754
  %v770 = vpack.c.b16 %v757, %v756
  %v771 = vpack.c.b16 %v759, %v758
  %v772 = vpack.c.b16 %v761, %v760
  %v773 = vpack.c.b16 %v763, %v762
  %v774 = vpack.c.b16 %v765, %v764
  %v775 = vpack.c.b16 %v767, %v766
  %784 = vmatprep.subr.bf16.mxu0 0
  %785 = vmatpush1.bf16.msra.mxu0 %v768
  %786 = vmatprep.subr.bf16.mxu0 0
  %787 = vmatpush1.bf16.msra.mxu0 %v769
  %788 = vmatprep.subr.bf16.mxu0 0
  %789 = vmatpush1.bf16.msra.mxu0 %v770
  %790 = vmatprep.subr.bf16.mxu0 0
  %791 = vmatpush1.bf16.msra.mxu0 %v771
  %792 = vmatprep.subr.bf16.mxu0 0
  %793 = vmatpush1.bf16.msra.mxu0 %v772
  %794 = vmatprep.subr.bf16.mxu0 0
  %795 = vmatpush1.bf16.msra.mxu0 %v773
  %796 = vmatprep.subr.bf16.mxu0 0
  %797 = vmatpush1.bf16.msra.mxu0 %v774
  %798 = vmatprep.subr.bf16.mxu0 0
  %799 = vmatpush1.bf16.msra.mxu0 %v775
  %800 = vmatprep.subr.bf16.mxu0 0
  %801 = vmatpush1.bf16.msra.mxu0 0
  %802 = vmatprep.subr.bf16.mxu0 0
  %803 = vmatpush1.bf16.msra.mxu0 0
  %804 = vmatprep.subr.bf16.mxu0 0
  %805 = vmatpush1.bf16.msra.mxu0 0
  %806 = vmatprep.subr.bf16.mxu0 0
  %807 = vmatpush1.bf16.msra.mxu0 0
  %808 = vmatprep.subr.bf16.mxu0 0
  %809 = vmatpush1.bf16.msra.mxu0 0
  %810 = vmatprep.subr.bf16.mxu0 0
  %811 = vmatpush1.bf16.msra.mxu0 0
  %812 = vmatprep.subr.bf16.mxu0 0
  %813 = vmatpush1.bf16.msra.mxu0 0
  %814 = vmatprep.subr.bf16.mxu0 0
  %815 = vmatpush1.bf16.msra.mxu0 0
  %816 = vmatprep.mubr.bf16.mxu0 0
  %817 = vmatmul.mubr.bf16.gmra.mrb[0].mxu0 %v712
  %v818 = vpop.f32.mrb[0].mxu0
  %v819 = vadd.f32 %v734, %v818
  %v820 = vpop.f32.mrb[0].mxu0
  %v821 = vpop.f32.mrb[0].mxu0
  %v822 = vpop.f32.mrb[0].mxu0
  %823 = vdwg.mxu0
  %v824 = vpack.c.bf16 %v819, %v819
  %825 = vst [vmem:[%s7] sm:$0x1] %v824
  // Predicated region
  $region30: #{classification_head.1} parent=0 // pred_check
    _
  $region31: #{classification_head.1} parent=0 // pred_check_branch
    %827 = sbr.rel (0) target = $region33
  $region32: #{classification_head.1} parent=0 // pred_region
    _
  $region33: #{classification_head.1} parent=0 // pred_fallthru
    _
  // Predicated region
  $region34: #{classification_head.1} parent=0 // pred_check
    _
  $region35: #{classification_head.1} parent=0 // pred_check_branch
    %829 = sbr.rel (0) target = $region37
  $region36: #{classification_head.1} parent=0 // pred_region
    _
  $region37: #{classification_head.1} parent=0 // pred_fallthru
    _

</llo_original>
